<compile_context>
chip_gen: v6e
topology: v6e:2x2x1
jax: 0.10.0
libtpu: 0.0.40
codegen_flags: <defaults>
</compile_context>

<pallas_src>
import functools

import jax
import jax.numpy as jnp
import numpy as np
from jax.experimental import pallas as pl
from jax.experimental.pallas import tpu as pltpu


def _cdiv(a, b):
    return -(-a // b)


def _vmem_capacity_bytes():
    """Per-core VMEM capacity; conservative fallback if unavailable."""
    try:
        info = pltpu.get_tpu_info()
        cap = getattr(info, "vmem_capacity_bytes", None)
        if cap:
            return int(cap)
    except Exception:
        pass
    return 64 * 1024 * 1024  # v7x per-TC (the smallest current generation)


def _mmm_kernel(f1_ref, f2_ref, f3_ref, o_ref, *, margin, inv_m, num_groups,
                group_block):
    """One grid step handles `group_block` groups.

    f*_ref : (Gb, M, D) blocks in the input dtype (e.g. bf16), unpadded.
    o_ref  : (1, 8, 128) f32 tile; partial loss sum at [0,0,0], zeros elsewhere.
    """

    def group_sums(ref):
        # f32 accumulation without materializing a block-sized f32 copy.
        return jnp.sum(ref[...], axis=1, dtype=jnp.float32)          # (Gb, D)

    s1 = group_sums(f1_ref)
    s2 = group_sums(f2_ref)
    s3 = group_sums(f3_ref)

    # centers = sums / M; MSE(reduction='sum') over centers == ||s_a - s_b||^2 / M^2
    inv_m2 = jnp.float32(inv_m) * jnp.float32(inv_m)

    def sq_dist(a, b):
        diff = a - b
        return jnp.sum(diff * diff, axis=1, keepdims=True) * inv_m2  # (Gb, 1)

    d12 = sq_dist(s1, s2)
    d23 = sq_dist(s2, s3)
    d13 = sq_dist(s1, s3)

    m = jnp.float32(margin)
    loss = jnp.maximum(
        jnp.maximum(jnp.abs(m - d12), jnp.abs(m - d23)),
        jnp.abs(m - d13),
    )                                                                # (Gb, 1)

    # Mask garbage groups of the ragged last block BEFORE the sum (safe even
    # if the out-of-bounds data contains Inf/NaN).
    gidx = pl.program_id(0) * group_block + jax.lax.broadcasted_iota(
        jnp.int32, loss.shape, 0)
    loss = jnp.where(gidx < num_groups, loss, jnp.float32(0.0))
    partial = jnp.sum(loss)

    # Scalar at [0,0,0], zeros elsewhere -> wrapper does a dense jnp.sum.
    row = jax.lax.broadcasted_iota(jnp.int32, o_ref.shape, 1)
    col = jax.lax.broadcasted_iota(jnp.int32, o_ref.shape, 2)
    o_ref[...] = jnp.where((row == 0) & (col == 0), partial, jnp.float32(0.0))


def multi_modal_margin_loss(feat1, feat2, feat3, label1, margin=3.0):
    """Pallas implementation of multiModalMarginLossNew (dist_type='l2')."""
    labels = np.asarray(label1)
    num_groups = int(len(np.unique(labels)))   # static, like len(label1.unique())

    f1 = jnp.asarray(feat1)
    f2 = jnp.asarray(feat2)
    f3 = jnp.asarray(feat3)
    if not jnp.issubdtype(f1.dtype, jnp.floating):
        f1, f2, f3 = (x.astype(jnp.float32) for x in (f1, f2, f3))

    n = f1.shape[0]
    # torch.chunk with divisible batch gives equal chunks; non-divisible
    # batches (unequal chunks) are a documented restriction.
    assert n % num_groups == 0, "batch must be divisible by number of unique labels"
    m_per_group = n // num_groups
    d = int(np.prod(f1.shape[1:])) if f1.ndim > 1 else 1

    # Pure reshape (no copy, no padding).
    f1 = f1.reshape(num_groups, m_per_group, d)
    f2 = f2.reshape(num_groups, m_per_group, d)
    f3 = f3.reshape(num_groups, m_per_group, d)

    itemsize = jnp.dtype(f1.dtype).itemsize
    bytes_per_group = m_per_group * d * itemsize

    # Per-generation VMEM budget: 2 (double buffer) x 3 inputs x block plus
    # headroom must stay well inside VMEM (64 MiB/TC v7x, 128 MiB v5e/v6e).
    vmem_cap = _vmem_capacity_bytes()
    usable = (vmem_cap * 3) // 4
    per_input_max = max(usable // 24, 512 * 1024)   # ~2 MiB on v7x, ~4 MiB on v6e
    max_block_bytes = min(4 * 1024 * 1024, per_input_max)
    target_block_bytes = min(2 * 1024 * 1024, max_block_bytes)

    gb = max(1, _cdiv(target_block_bytes, bytes_per_group))
    gb = min(gb, max(1, max_block_bytes // bytes_per_group))
    gb = min(gb, num_groups)
    if num_groups > 1:
        # >= 2 grid blocks so v7x's two TensorCores both get work.
        gb = min(gb, _cdiv(num_groups, 2))
    num_blocks = _cdiv(num_groups, gb)

    block_bytes = gb * bytes_per_group
    needed_vmem = 6 * block_bytes + 4 * 1024 * 1024
    vmem_limit = int(min(usable, max(needed_vmem, 32 * 1024 * 1024)))

    kernel = functools.partial(
        _mmm_kernel,
        margin=float(margin),
        inv_m=1.0 / float(m_per_group),
        num_groups=num_groups,
        group_block=gb,
    )

    # Last two block dims equal the full array extents -> no (8,128) padding
    # requirement and no extra HBM bytes.
    in_spec = pl.BlockSpec((gb, m_per_group, d), lambda g: (g, 0, 0))

    out = pl.pallas_call(
        kernel,
        out_shape=jax.ShapeDtypeStruct((num_blocks, 8, 128), jnp.float32),
        grid_spec=pltpu.PrefetchScalarGridSpec(
            num_scalar_prefetch=0,
            grid=(num_blocks,),
            in_specs=[in_spec, in_spec, in_spec],
            out_specs=pl.BlockSpec((1, 8, 128), lambda g: (g, 0, 0)),
        ),
        compiler_params=pltpu.CompilerParams(
            dimension_semantics=("parallel",),      # per-block outputs -> no races
            vmem_limit_bytes=vmem_limit,
        ),
    )(f1, f2, f3)

    # Dense final reduction (non-[0,0,0] entries are exactly zero).
    return jnp.sum(out)


def _reference(feat1, feat2, feat3, label1, margin=3.0):
    """Pure-JAX reference mirroring the PyTorch forward (l2 path)."""
    labels = np.asarray(label1)
    g = int(len(np.unique(labels)))
    f1 = jnp.asarray(feat1).astype(jnp.float32)
    f2 = jnp.asarray(feat2).astype(jnp.float32)
    f3 = jnp.asarray(feat3).astype(jnp.float32)
    n = f1.shape[0]
    m = n // g
    d = int(np.prod(f1.shape[1:])) if f1.ndim > 1 else 1
    f1 = f1.reshape(g, m, d)
    f2 = f2.reshape(g, m, d)
    f3 = f3.reshape(g, m, d)
    total = jnp.float32(0.0)
    for i in range(g):
        c1 = jnp.mean(f1[i], axis=0)
        c2 = jnp.mean(f2[i], axis=0)
        c3 = jnp.mean(f3[i], axis=0)
        d12 = jnp.sum((c1 - c2) ** 2)
        d23 = jnp.sum((c2 - c3) ** 2)
        d13 = jnp.sum((c1 - c3) ** 2)
        total = total + jnp.maximum(
            jnp.maximum(jnp.abs(margin - d12), jnp.abs(margin - d23)),
            jnp.abs(margin - d13),
        )
    return total


if __name__ == "__main__":
    key = jax.random.PRNGKey(0)
    k1, k2, k3 = jax.random.split(key, 3)

    # batch=32, feature dim=48, four unique labels -> four contiguous chunks of 8
    N, D, G = 32, 48, 4
    feat1 = jax.random.normal(k1, (N, D), dtype=jnp.bfloat16)
    feat2 = jax.random.normal(k2, (N, D), dtype=jnp.bfloat16)
    feat3 = jax.random.normal(k3, (N, D), dtype=jnp.bfloat16)
    label1 = np.repeat(np.arange(G, dtype=np.int32), N // G)

    loss = jax.block_until_ready(
        multi_modal_margin_loss(feat1, feat2, feat3, label1, margin=3.0))
    ref = jax.block_until_ready(
        _reference(feat1, feat2, feat3, label1, margin=3.0))

    assert np.allclose(np.asarray(loss), np.asarray(ref), rtol=1e-4, atol=1e-4), (
        f"mismatch: pallas={loss} ref={ref}"
    )

    print("KERNEL_OK")
</pallas_src>

<mosaic_0001>
module attributes {stable_mosaic.version = 11 : i64} {
  func.func @_mmm_kernel(%arg0: i32, %arg1: memref<2x8x48xbf16, #tpu.memory_space<vmem>>, %arg2: memref<2x8x48xbf16, #tpu.memory_space<vmem>>, %arg3: memref<2x8x48xbf16, #tpu.memory_space<vmem>>, %arg4: memref<1x8x128xf32, #tpu.memory_space<vmem>>) attributes {dimension_semantics = [#tpu.dimension_semantics<parallel>], iteration_bounds = array<i64: 2>, scalar_prefetch = 0 : i64, scratch_operands = 0 : i64, tpu.core_type = #tpu.core_type<tc>, window_params = [{transform_indices = @transform_0, window_bounds = array<i64: 2, 8, 48>}, {transform_indices = @transform_1, window_bounds = array<i64: 2, 8, 48>}, {transform_indices = @transform_2, window_bounds = array<i64: 2, 8, 48>}, {transform_indices = @transform_3, window_bounds = array<i64: 1, 8, 128>}]} {
    %c0 = arith.constant 0 : index
    %c0_0 = arith.constant 0 : index
    %c0_1 = arith.constant 0 : index
    %0 = vector.load %arg1[%c0, %c0_0, %c0_1] : memref<2x8x48xbf16, #tpu.memory_space<vmem>>, vector<2x8x48xbf16>
    %1 = arith.extf %0 : vector<2x8x48xbf16> to vector<2x8x48xf32>
    %cst = arith.constant dense<0.000000e+00> : vector<2x48xf32>
    %2 = vector.multi_reduction <add>, %1, %cst [1] : vector<2x8x48xf32> to vector<2x48xf32>
    %c0_2 = arith.constant 0 : index
    %c0_3 = arith.constant 0 : index
    %c0_4 = arith.constant 0 : index
    %3 = vector.load %arg2[%c0_2, %c0_3, %c0_4] : memref<2x8x48xbf16, #tpu.memory_space<vmem>>, vector<2x8x48xbf16>
    %4 = arith.extf %3 : vector<2x8x48xbf16> to vector<2x8x48xf32>
    %cst_5 = arith.constant dense<0.000000e+00> : vector<2x48xf32>
    %5 = vector.multi_reduction <add>, %4, %cst_5 [1] : vector<2x8x48xf32> to vector<2x48xf32>
    %c0_6 = arith.constant 0 : index
    %c0_7 = arith.constant 0 : index
    %c0_8 = arith.constant 0 : index
    %6 = vector.load %arg3[%c0_6, %c0_7, %c0_8] : memref<2x8x48xbf16, #tpu.memory_space<vmem>>, vector<2x8x48xbf16>
    %7 = arith.extf %6 : vector<2x8x48xbf16> to vector<2x8x48xf32>
    %cst_9 = arith.constant dense<0.000000e+00> : vector<2x48xf32>
    %8 = vector.multi_reduction <add>, %7, %cst_9 [1] : vector<2x8x48xf32> to vector<2x48xf32>
    %cst_10 = arith.constant 1.250000e-01 : f32
    %cst_11 = arith.constant 1.250000e-01 : f32
    %9 = arith.mulf %cst_10, %cst_11 : f32
    %10 = arith.subf %2, %5 : vector<2x48xf32>
    %11 = arith.mulf %10, %10 : vector<2x48xf32>
    %cst_12 = arith.constant dense<0.000000e+00> : vector<2xf32>
    %12 = vector.multi_reduction <add>, %11, %cst_12 [1] : vector<2x48xf32> to vector<2xf32>
    %13 = vector.shape_cast %12 : vector<2xf32> to vector<2x1xf32>
    %14 = vector.broadcast %9 : f32 to vector<2x1xf32>
    %15 = arith.mulf %13, %14 : vector<2x1xf32>
    %16 = arith.subf %5, %8 : vector<2x48xf32>
    %17 = arith.mulf %16, %16 : vector<2x48xf32>
    %cst_13 = arith.constant dense<0.000000e+00> : vector<2xf32>
    %18 = vector.multi_reduction <add>, %17, %cst_13 [1] : vector<2x48xf32> to vector<2xf32>
    %19 = vector.shape_cast %18 : vector<2xf32> to vector<2x1xf32>
    %20 = vector.broadcast %9 : f32 to vector<2x1xf32>
    %21 = arith.mulf %19, %20 : vector<2x1xf32>
    %22 = arith.subf %2, %8 : vector<2x48xf32>
    %23 = arith.mulf %22, %22 : vector<2x48xf32>
    %cst_14 = arith.constant dense<0.000000e+00> : vector<2xf32>
    %24 = vector.multi_reduction <add>, %23, %cst_14 [1] : vector<2x48xf32> to vector<2xf32>
    %25 = vector.shape_cast %24 : vector<2xf32> to vector<2x1xf32>
    %26 = vector.broadcast %9 : f32 to vector<2x1xf32>
    %27 = arith.mulf %25, %26 : vector<2x1xf32>
    %cst_15 = arith.constant 3.000000e+00 : f32
    %28 = vector.broadcast %cst_15 : f32 to vector<2x1xf32>
    %29 = arith.subf %28, %15 : vector<2x1xf32>
    %30 = math.absf %29 : vector<2x1xf32>
    %cst_16 = arith.constant 3.000000e+00 : f32
    %31 = vector.broadcast %cst_16 : f32 to vector<2x1xf32>
    %32 = arith.subf %31, %21 : vector<2x1xf32>
    %33 = math.absf %32 : vector<2x1xf32>
    %34 = arith.maximumf %30, %33 : vector<2x1xf32>
    %cst_17 = arith.constant 3.000000e+00 : f32
    %35 = vector.broadcast %cst_17 : f32 to vector<2x1xf32>
    %36 = arith.subf %35, %27 : vector<2x1xf32>
    %37 = math.absf %36 : vector<2x1xf32>
    %38 = arith.maximumf %34, %37 : vector<2x1xf32>
    %c2_i32 = arith.constant 2 : i32
    %39 = arith.muli %arg0, %c2_i32 : i32
    %40 = tpu.iota {dimensions = array<i32: 0>} : vector<2x1xi32>
    %41 = vector.broadcast %39 : i32 to vector<2x1xi32>
    %42 = arith.addi %41, %40 : vector<2x1xi32>
    %c4_i32 = arith.constant 4 : i32
    %43 = vector.broadcast %c4_i32 : i32 to vector<2x1xi32>
    %44 = arith.cmpi slt, %42, %43 : vector<2x1xi32>
    %cst_18 = arith.constant 0.000000e+00 : f32
    %45 = vector.broadcast %cst_18 : f32 to vector<2x1xf32>
    %46 = arith.select %44, %38, %45 : vector<2x1xi1>, vector<2x1xf32>
    %47 = vector.shape_cast %46 : vector<2x1xf32> to vector<1x2x1xf32>
    %cst_19 = arith.constant dense<0.000000e+00> : vector<1xf32>
    %48 = vector.multi_reduction <add>, %47, %cst_19 [1, 2] : vector<1x2x1xf32> to vector<1xf32>
    %49 = vector.shape_cast %48 : vector<1xf32> to vector<1x1x1xf32>
    %50 = vector.extract %49[0, 0, 0] : f32 from vector<1x1x1xf32>
    %51 = tpu.iota {dimensions = array<i32: 1>} : vector<1x8x128xi32>
    %52 = tpu.iota {dimensions = array<i32: 2>} : vector<1x8x128xi32>
    %c0_i32 = arith.constant 0 : i32
    %53 = vector.broadcast %c0_i32 : i32 to vector<1x8x128xi32>
    %54 = arith.cmpi eq, %51, %53 : vector<1x8x128xi32>
    %c0_i32_20 = arith.constant 0 : i32
    %55 = vector.broadcast %c0_i32_20 : i32 to vector<1x8x128xi32>
    %56 = arith.cmpi eq, %52, %55 : vector<1x8x128xi32>
    %57 = arith.andi %54, %56 : vector<1x8x128xi1>
    %cst_21 = arith.constant 0.000000e+00 : f32
    %58 = vector.broadcast %50 : f32 to vector<1x8x128xf32>
    %59 = vector.broadcast %cst_21 : f32 to vector<1x8x128xf32>
    %60 = arith.select %57, %58, %59 : vector<1x8x128xi1>, vector<1x8x128xf32>
    %c0_22 = arith.constant 0 : index
    %c0_23 = arith.constant 0 : index
    %c0_24 = arith.constant 0 : index
    %61 = vector.load %arg4[%c0_22, %c0_23, %c0_24] : memref<1x8x128xf32, #tpu.memory_space<vmem>>, vector<1x8x128xf32>
    tpu.vector_store %arg4[%c0_22, %c0_23, %c0_24], %60 {strides = array<i32>} : memref<1x8x128xf32, #tpu.memory_space<vmem>>, vector<1x8x128xf32>,
    return
  }
  func.func @transform_0(%arg0: i32) -> (i32, i32, i32) {
    %c0_i32 = arith.constant 0 : i32
    %c0_i32_0 = arith.constant 0 : i32
    %c0_i32_1 = arith.constant 0 : i32
    return %arg0, %c0_i32, %c0_i32_0 : i32, i32, i32
  }
  func.func @transform_1(%arg0: i32) -> (i32, i32, i32) {
    %c0_i32 = arith.constant 0 : i32
    %c0_i32_0 = arith.constant 0 : i32
    %c0_i32_1 = arith.constant 0 : i32
    return %arg0, %c0_i32, %c0_i32_0 : i32, i32, i32
  }
  func.func @transform_2(%arg0: i32) -> (i32, i32, i32) {
    %c0_i32 = arith.constant 0 : i32
    %c0_i32_0 = arith.constant 0 : i32
    %c0_i32_1 = arith.constant 0 : i32
    return %arg0, %c0_i32, %c0_i32_0 : i32, i32, i32
  }
  func.func @transform_3(%arg0: i32) -> (i32, i32, i32) {
    %c0_i32 = arith.constant 0 : i32
    %c0_i32_0 = arith.constant 0 : i32
    %c0_i32_1 = arith.constant 0 : i32
    return %arg0, %c0_i32, %c0_i32_0 : i32, i32, i32
  }
}

</mosaic_0001>

<llo_original>
// kernel: tpu_custom_call.1
$region0: #{tpu_custom_call.1}
  #allocation0 [shape = 'u32[]', space=smem, size = 0x4, offset = 0x4, fixed_abs, tag = 'smem constant byte address 0x4 - core index']
  #allocation1 [shape = 'u32[144,128]{1,0:T(1,128)}', space=vmem, size = 0x12000, scoped, tag = 'internal scratch']
  %s0 = inlined_call_operand.hbm [shape: bf16[4,8,48], index: 0, kind: input, shape index: {}]
  %s1 = inlined_call_operand.hbm [shape: bf16[4,8,48], index: 1, kind: input, shape index: {}]
  %s2 = inlined_call_operand.hbm [shape: bf16[4,8,48], index: 2, kind: input, shape index: {}]
  %s3 = inlined_call_operand.hbm [shape: f32[2,8,128], index: 3, kind: output, shape index: {}]
  %s4 = sld [smem:[#allocation0]]
  $region57: #{tpu_custom_call.1} parent=0
    _
  %s6 = ssub.s32 1, %s4
  %s7 = scalar_select 0, %s6, %s4
  $region1: #{tpu_custom_call.1} parent=0
    #allocation2 [shape = 'u8[8192]{0}', space=vmem, size = 0x2000, scoped, tag = 'input window, operand 0']
    #allocation3 [shape = 's32[2]{0}', space=sflag, size = 0x8, scoped, tag = 'scoped memory for tpu_custom_call.1']
    #allocation4 [shape = 's32[2]{0}', space=sflag, size = 0x8, scoped, tag = 'scoped memory for tpu_custom_call.1']
    #allocation5 [shape = 'u8[8192]{0}', space=vmem, size = 0x2000, scoped, tag = 'input window, operand 1']
    #allocation6 [shape = 's32[2]{0}', space=sflag, size = 0x8, scoped, tag = 'scoped memory for tpu_custom_call.1']
    #allocation7 [shape = 'u8[8192]{0}', space=vmem, size = 0x2000, scoped, tag = 'input window, operand 2']
    #allocation8 [shape = 'u8[8192]{0}', space=vmem, size = 0x2000, scoped, tag = 'output window, operand 0']
    %8 = vsyncpa [#allocation3], 0
    %s9 = scalar_lea.sflag [#allocation3], 1
    %10 = vsyncpa %s9, 0
    %11 = vsyncpa [#allocation6], 0
    %s12 = scalar_lea.sflag [#allocation6], 1
    %13 = vsyncpa %s12, 0
    %14 = vsyncpa [#allocation4], 0
    %s15 = scalar_lea.sflag [#allocation4], 1
    %16 = vsyncpa %s15, 0
    loop: start=0, step=1, limit=4
    $region2: #{tpu_custom_call.1} parent=1 // loop_pre_header
      _
    $region3: #{tpu_custom_call.1} parent=1 // loop_header
      %s18 = sphi 0, %s22
      %p19 = scmp.ge.s32.totalorder %s18, 4
      %s28 = sphi 0, %s30
      %s31 = sphi 0, %s28
      %s32 = sphi 0, %s31
      %s48 = sphi 0, %s32
      %s54 = sphi 0, %s56
      %s57 = sphi 0, %s54
      %s58 = sphi 0, %s57
      %s74 = sphi 0, %s58
      %s80 = sphi 0, %s82
      %s83 = sphi 0, %s80
      %s84 = sphi 0, %s83
      %s100 = sphi 0, %s84
      %s106 = sphi 0, %s108
      %s109 = sphi 0, %s106
      %s110 = sphi 0, %s109
      %s126 = sphi 0, %s110
    $region4: #{tpu_custom_call.1} parent=1 // loop_header_branch
      %21 = sbr.rel (%p19) target = $region8
    $region5: #{tpu_custom_call.1} parent=1 // loop_body
      %s23 = ssub.s32 %s18, 1
      %s24 = ssub.s32 %s18, 2
      %s25 = sadd.s32 %s18, 1
      %s26 = ssub.s32 %s18, %s25
      %p27 = scmp.eq.s32.totalorder %s26, 0
      %s29 = sadd.s32 %s28, 1
      %s30 = scalar_select %p27, %s28, %s29
      %p33 = pneg %p27
      %p34 = scmp.eq.s32.totalorder %s18, 1
      %p35 = por %p33, %p34
      %p36 = scmp.ne.s32.totalorder %s28, %s31
      %p37 = scmp.eq.s32.totalorder %s18, 0
      %p38 = por %p36, %p37
      %p39 = scmp.ne.s32.totalorder %s28, %s31
      %p40 = scmp.eq.s32.totalorder %s23, 1
      %p41 = por %p39, %p40
      %p42 = scmp.ne.s32.totalorder %s31, %s32
      %p43 = scmp.eq.s32.totalorder %s23, 0
      %p44 = por %p42, %p43
      %p45 = scmp.ne.s32.totalorder %s31, %s32
      %p46 = scmp.eq.s32.totalorder %s24, 1
      %p47 = por %p45, %p46
      %p49 = scmp.ne.s32.totalorder %s32, %s48
      %p50 = scmp.eq.s32.totalorder %s24, 0
      %p51 = por %p49, %p50
      %s52 = ssub.s32 %s18, %s25
      %p53 = scmp.eq.s32.totalorder %s52, 0
      %s55 = sadd.s32 %s54, 1
      %s56 = scalar_select %p53, %s54, %s55
      %p59 = pneg %p53
      %p60 = scmp.eq.s32.totalorder %s18, 1
      %p61 = por %p59, %p60
      %p62 = scmp.ne.s32.totalorder %s54, %s57
      %p63 = scmp.eq.s32.totalorder %s18, 0
      %p64 = por %p62, %p63
      %p65 = scmp.ne.s32.totalorder %s54, %s57
      %p66 = scmp.eq.s32.totalorder %s23, 1
      %p67 = por %p65, %p66
      %p68 = scmp.ne.s32.totalorder %s57, %s58
      %p69 = scmp.eq.s32.totalorder %s23, 0
      %p70 = por %p68, %p69
      %p71 = scmp.ne.s32.totalorder %s57, %s58
      %p72 = scmp.eq.s32.totalorder %s24, 1
      %p73 = por %p71, %p72
      %p75 = scmp.ne.s32.totalorder %s58, %s74
      %p76 = scmp.eq.s32.totalorder %s24, 0
      %p77 = por %p75, %p76
      %s78 = ssub.s32 %s18, %s25
      %p79 = scmp.eq.s32.totalorder %s78, 0
      %s81 = sadd.s32 %s80, 1
      %s82 = scalar_select %p79, %s80, %s81
      %p85 = pneg %p79
      %p86 = scmp.eq.s32.totalorder %s18, 1
      %p87 = por %p85, %p86
      %p88 = scmp.ne.s32.totalorder %s80, %s83
      %p89 = scmp.eq.s32.totalorder %s18, 0
      %p90 = por %p88, %p89
      %p91 = scmp.ne.s32.totalorder %s80, %s83
      %p92 = scmp.eq.s32.totalorder %s23, 1
      %p93 = por %p91, %p92
      %p94 = scmp.ne.s32.totalorder %s83, %s84
      %p95 = scmp.eq.s32.totalorder %s23, 0
      %p96 = por %p94, %p95
      %p97 = scmp.ne.s32.totalorder %s83, %s84
      %p98 = scmp.eq.s32.totalorder %s24, 1
      %p99 = por %p97, %p98
      %p101 = scmp.ne.s32.totalorder %s84, %s100
      %p102 = scmp.eq.s32.totalorder %s24, 0
      %p103 = por %p101, %p102
      %s104 = ssub.s32 %s18, %s25
      %p105 = scmp.eq.s32.totalorder %s104, 0
      %s107 = sadd.s32 %s106, 1
      %s108 = scalar_select %p105, %s106, %s107
      %p111 = pneg %p105
      %p112 = scmp.eq.s32.totalorder %s18, 1
      %p113 = por %p111, %p112
      %p114 = scmp.ne.s32.totalorder %s106, %s109
      %p115 = scmp.eq.s32.totalorder %s18, 0
      %p116 = por %p114, %p115
      %p117 = scmp.ne.s32.totalorder %s106, %s109
      %p118 = scmp.eq.s32.totalorder %s23, 1
      %p119 = por %p117, %p118
      %p120 = scmp.ne.s32.totalorder %s109, %s110
      %p121 = scmp.eq.s32.totalorder %s23, 0
      %p122 = por %p120, %p121
      %p123 = scmp.ne.s32.totalorder %s109, %s110
      %p124 = scmp.eq.s32.totalorder %s24, 1
      %p125 = por %p123, %p124
      %p127 = scmp.ne.s32.totalorder %s110, %s126
      %p128 = scmp.eq.s32.totalorder %s24, 0
      %p129 = por %p127, %p128
      %p130 = scmp.le.s32.totalorder 1, %s18
      %p131 = scmp.lt.s32.totalorder %s18, 3
      %p132 = pnand %p130, %p131
      %p133 = pneg %p132
      // Predicated region
      $region9: #{tpu_custom_call.1} parent=5 // pred_check
        _
      $region10: #{tpu_custom_call.1} parent=5 // pred_check_branch
        %135 = sbr.rel (%p132) target = $region12
      $region11: #{tpu_custom_call.1} parent=5 // pred_region
        %s136 = ssub.s32 %s18, 1
      $region12: #{tpu_custom_call.1} parent=5 // pred_fallthru
        _
      %p137 = scmp.lt.s32.totalorder %s18, 2
      // Predicated region
      $region13: #{tpu_custom_call.1} parent=5 // pred_check
        %p138 = pneg %p137
      $region14: #{tpu_custom_call.1} parent=5 // pred_check_branch
        %140 = sbr.rel (%p138) target = $region16
      $region15: #{tpu_custom_call.1} parent=5 // pred_region
        // Predicated region
        $region17: #{tpu_custom_call.1} parent=15 // pred_check
          %p141 = pneg %p38
        $region18: #{tpu_custom_call.1} parent=15 // pred_check_branch
          %143 = sbr.rel (%p141) target = $region20
        $region19: #{tpu_custom_call.1} parent=15 // pred_region
          %s144 = sand.u32 %s28, 1
          %s145 = scalar_lea.sflag [#allocation3], %s144
          %s146 = sand.u32 %s28, 1
          %s147 = smul.addr %s146, 8
          %s148 = scalar_lea.vmem [#allocation2], %s147
          %s149 = smul.u32 2, %s18
          %s151 = ssub.s32 128, 128
          %152 = vsyncadd %s145, %s151
          %s153 = smul.addr %s149, 64
          %s154 = scalar_lea.hbm %s0, %s153
          %s155 = sshll.u32 %s148, 4
          %s156 = int_to_ptr.vmem [resolvable:$true] %s155
          %161 = dma.hbm_to_vmem [thread:$0]  %s154, 128, %s156, %s145, 64, 64, 4
        $region20: #{tpu_custom_call.1} parent=15 // pred_fallthru
          _
        // Predicated region
        $region21: #{tpu_custom_call.1} parent=15 // pred_check
          %p162 = pneg %p64
        $region22: #{tpu_custom_call.1} parent=15 // pred_check_branch
          %164 = sbr.rel (%p162) target = $region24
        $region23: #{tpu_custom_call.1} parent=15 // pred_region
          %s165 = sand.u32 %s18, 1
          %s166 = scalar_lea.sflag [#allocation6], %s165
          %s167 = sand.u32 %s54, 1
          %s168 = smul.addr %s167, 8
          %s169 = scalar_lea.vmem [#allocation5], %s168
          %s170 = smul.u32 2, %s18
          %s172 = ssub.s32 128, 128
          %173 = vsyncadd %s166, %s172
          %s174 = smul.addr %s170, 64
          %s175 = scalar_lea.hbm %s1, %s174
          %s176 = sshll.u32 %s169, 4
          %s177 = int_to_ptr.vmem [resolvable:$true] %s176
          %182 = dma.hbm_to_vmem [thread:$0]  %s175, 128, %s177, %s166, 64, 64, 4
        $region24: #{tpu_custom_call.1} parent=15 // pred_fallthru
          _
        // Predicated region
        $region25: #{tpu_custom_call.1} parent=15 // pred_check
          %p183 = pneg %p90
        $region26: #{tpu_custom_call.1} parent=15 // pred_check_branch
          %185 = sbr.rel (%p183) target = $region28
        $region27: #{tpu_custom_call.1} parent=15 // pred_region
          %s186 = sand.u32 %s18, 1
          %s187 = scalar_lea.sflag [#allocation6], %s186
          %s188 = sand.u32 %s80, 1
          %s189 = smul.addr %s188, 8
          %s190 = scalar_lea.vmem [#allocation7], %s189
          %s191 = smul.u32 2, %s18
          %s193 = ssub.s32 128, 128
          %194 = vsyncadd %s187, %s193
          %s195 = smul.addr %s191, 64
          %s196 = scalar_lea.hbm %s2, %s195
          %s197 = sshll.u32 %s190, 4
          %s198 = int_to_ptr.vmem [resolvable:$true] %s197
          %203 = dma.hbm_to_vmem [thread:$0]  %s196, 128, %s198, %s187, 64, 64, 4
        $region28: #{tpu_custom_call.1} parent=15 // pred_fallthru
          _
      $region16: #{tpu_custom_call.1} parent=5 // pred_fallthru
        _
      %p204 = scmp.le.s32.totalorder 1, %s18
      %p205 = scmp.lt.s32.totalorder %s18, 3
      %p206 = pnand %p204, %p205
      %p207 = pneg %p206
      // Predicated region
      $region29: #{tpu_custom_call.1} parent=5 // pred_check
        _
      $region30: #{tpu_custom_call.1} parent=5 // pred_check_branch
        %209 = sbr.rel (%p206) target = $region32
      $region31: #{tpu_custom_call.1} parent=5 // pred_region
        %s210 = ssub.s32 %s18, 1
        %s211 = sand.u32 %s31, 1
        %s212 = scalar_lea.sflag [#allocation3], %s211
        %s213 = sand.u32 %s31, 1
        %s214 = smul.addr %s213, 8
        %s215 = scalar_lea.vmem [#allocation2], %s214
        // Predicated region
        $region33: #{tpu_custom_call.1} parent=31 // pred_check
          %p216 = pneg %p44
        $region34: #{tpu_custom_call.1} parent=31 // pred_check_branch
          %218 = sbr.rel (%p216) target = $region36
        $region35: #{tpu_custom_call.1} parent=31 // pred_region
          %219 = dma.done %s212, 128
        $region36: #{tpu_custom_call.1} parent=31 // pred_fallthru
          _
        %s220 = sand.u32 %s23, 1
        %s221 = scalar_lea.sflag [#allocation6], %s220
        %s222 = sand.u32 %s57, 1
        %s223 = smul.addr %s222, 8
        %s224 = scalar_lea.vmem [#allocation5], %s223
        // Predicated region
        $region37: #{tpu_custom_call.1} parent=31 // pred_check
          %p225 = pneg %p70
        $region38: #{tpu_custom_call.1} parent=31 // pred_check_branch
          %227 = sbr.rel (%p225) target = $region40
        $region39: #{tpu_custom_call.1} parent=31 // pred_region
          %228 = dma.done %s221, 128
        $region40: #{tpu_custom_call.1} parent=31 // pred_fallthru
          _
        %s229 = sand.u32 %s23, 1
        %s230 = scalar_lea.sflag [#allocation6], %s229
        %s231 = sand.u32 %s83, 1
        %s232 = smul.addr %s231, 8
        %s233 = scalar_lea.vmem [#allocation7], %s232
        // Predicated region
        $region41: #{tpu_custom_call.1} parent=31 // pred_check
          %p234 = pneg %p96
        $region42: #{tpu_custom_call.1} parent=31 // pred_check_branch
          %236 = sbr.rel (%p234) target = $region44
        $region43: #{tpu_custom_call.1} parent=31 // pred_region
          %237 = dma.done %s230, 128
        $region44: #{tpu_custom_call.1} parent=31 // pred_fallthru
          _
        %s238 = sand.u32 %s31, 1
        %s239 = scalar_lea.sflag [#allocation3], %s238
        %s240 = sand.u32 %s31, 1
        %s241 = smul.addr %s240, 8
        %s242 = scalar_lea.vmem [#allocation2], %s241
        %p243 = pneg %p44
        %p244 = pneg %p41
        %s245 = sand.u32 %s23, 1
        %s246 = scalar_lea.sflag [#allocation6], %s245
        %s247 = sand.u32 %s57, 1
        %s248 = smul.addr %s247, 8
        %s249 = scalar_lea.vmem [#allocation5], %s248
        %p250 = pneg %p70
        %p251 = pneg %p67
        %s252 = sand.u32 %s23, 1
        %s253 = scalar_lea.sflag [#allocation6], %s252
        %s254 = sand.u32 %s83, 1
        %s255 = smul.addr %s254, 8
        %s256 = scalar_lea.vmem [#allocation7], %s255
        %p257 = pneg %p96
        %p258 = pneg %p93
        %p259 = pneg %p122
        %p260 = pneg %p119
        %s261 = sand.u32 %s109, 1
        %s262 = scalar_lea.sflag [#allocation4], %s261
        %s263 = sand.u32 %s109, 1
        %s264 = smul.addr %s263, 8
        %s265 = scalar_lea.vmem [#allocation8], %s264
        %s266 = smul.u32 2, %s23
        %s267 = smul.u32 2, %s23
        %s268 = smul.u32 2, %s23
        %v269 = vld [vmem:[%s215] sm:$0xf]
        %v270 = vld [vmem:[%s215 + $0x4] sm:$0xf]
        %v271 = vunpack.c.l.bf16 %v269
        %v272 = vunpack.c.l.bf16 %v270
        %vm273 = vcmask 392192
        %v274 = vsel %vm273, %v271, 0.0
        %v275 = vrot.slane %v274, 4
        %v276 = vadd.f32 %v274, %v275
        %v277 = vrot.slane %v276, 2
        %v278 = vadd.f32 %v276, %v277
        %v279 = vrot.slane %v278, 1
        %v280 = vadd.f32 %v278, %v279
        %v281 = vsel %vm273, %v272, 0.0
        %v282 = vrot.slane %v281, 4
        %v283 = vadd.f32 %v281, %v282
        %v284 = vrot.slane %v283, 2
        %v285 = vadd.f32 %v283, %v284
        %v286 = vrot.slane %v285, 1
        %v287 = vadd.f32 %v285, %v286
        %v288 = vld [vmem:[%s224] sm:$0xf]
        %v289 = vld [vmem:[%s224 + $0x4] sm:$0xf]
        %v290 = vunpack.c.l.bf16 %v288
        %v291 = vunpack.c.l.bf16 %v289
        %v292 = vsel %vm273, %v290, 0.0
        %v293 = vrot.slane %v292, 4
        %v294 = vadd.f32 %v292, %v293
        %v295 = vrot.slane %v294, 2
        %v296 = vadd.f32 %v294, %v295
        %v297 = vrot.slane %v296, 1
        %v298 = vadd.f32 %v296, %v297
        %v299 = vsel %vm273, %v291, 0.0
        %v300 = vrot.slane %v299, 4
        %v301 = vadd.f32 %v299, %v300
        %v302 = vrot.slane %v301, 2
        %v303 = vadd.f32 %v301, %v302
        %v304 = vrot.slane %v303, 1
        %v305 = vadd.f32 %v303, %v304
        %v306 = vld [vmem:[%s233] sm:$0xf]
        %v307 = vld [vmem:[%s233 + $0x4] sm:$0xf]
        %v308 = vunpack.c.l.bf16 %v306
        %v309 = vunpack.c.l.bf16 %v307
        %v310 = vsel %vm273, %v308, 0.0
        %v311 = vrot.slane %v310, 4
        %v312 = vadd.f32 %v310, %v311
        %v313 = vrot.slane %v312, 2
        %v314 = vadd.f32 %v312, %v313
        %v315 = vrot.slane %v314, 1
        %v316 = vadd.f32 %v314, %v315
        %v317 = vsel %vm273, %v309, 0.0
        %v318 = vrot.slane %v317, 4
        %v319 = vadd.f32 %v317, %v318
        %v320 = vrot.slane %v319, 2
        %v321 = vadd.f32 %v319, %v320
        %v322 = vrot.slane %v321, 1
        %v323 = vadd.f32 %v321, %v322
        %v324 = vsub.f32 %v280, %v298
        %v325 = vsub.f32 %v287, %v305
        %v326 = vmul.f32 %v324, %v324
        %v327 = vmul.f32 %v325, %v325
        %vm330 = vcmask 1041409
        %v331 = vsel %vm330, %v327, %v326
        %vm333 = vcmask 386048
        %v334 = vsel %vm333, %v331, 0.0
        %335 = vadd.xlane.f32.xlu0 %v334
        %v336 = vpop.xlane.xlu0 %335
        %v337 = vmul.f32 %v336, 0.015625
        %v338 = vsub.f32 %v298, %v316
        %v339 = vsub.f32 %v305, %v323
        %v340 = vmul.f32 %v338, %v338
        %v341 = vmul.f32 %v339, %v339
        %v344 = vsel %vm330, %v341, %v340
        %v346 = vsel %vm333, %v344, 0.0
        %347 = vadd.xlane.f32.xlu0 %v346
        %v348 = vpop.xlane.xlu0 %347
        %v349 = vmul.f32 %v348, 0.015625
        %v350 = vsub.f32 %v280, %v316
        %v351 = vsub.f32 %v287, %v323
        %v352 = vmul.f32 %v350, %v350
        %v353 = vmul.f32 %v351, %v351
        %v356 = vsel %vm330, %v353, %v352
        %v358 = vsel %vm333, %v356, 0.0
        %359 = vadd.xlane.f32.xlu0 %v358
        %v360 = vpop.xlane.xlu0 %359
        %v361 = vmul.f32 %v360, 0.015625
        %v362 = vsub.f32 3.0, %v337
        %v363 = vand.u32 2147483647, %v362
        %v364 = vsub.f32 3.0, %v349
        %v365 = vand.u32 2147483647, %v364
        %v366 = vmax.f32 %v363, %v365
        %v367 = vsub.f32 3.0, %v361
        %v368 = vand.u32 2147483647, %v367
        %v369 = vmax.f32 %v366, %v368
        %s370 = smul.u32 %s23, 2
        %v371 = vlaneseq
        %v372 = vshrl.u32 %v371, 7
        %v373 = vstv %s370
        %v374 = vadd.s32 %v373, %v372
        %vm375 = vcmp.lt.s32.totalorder %v374, 4
        %v376 = vsel %vm375, %v369, 0.0
        %vm377 = vcmask 1024
        %v378 = vsel %vm377, %v376, 0.0
        %379 = vadd.xlane.f32.xlu0 %v378
        %v380 = vpop.xlane.xlu0 %379
        %v381 = vrot.slane %v380, 4
        %v382 = vadd.f32 %v380, %v381
        %v383 = vrot.slane %v382, 2
        %v384 = vadd.f32 %v382, %v383
        %v385 = vrot.slane %v384, 1
        %v386 = vadd.f32 %v384, %v385
        %s387 = vtos %v386
        %v388 = vlaneseq
        %v389 = vand.u32 %v388, 127
        %vm390 = vcmp.eq.s32.totalorder %v372, 0
        %vm391 = vcmp.eq.s32.totalorder %v389, 0
        %vm392 = vmand %vm390, %vm391
        %v393 = vstv %s387
        %v394 = vsel %vm392, %v393, 0.0
        %395 = vst [vmem:[%s265] sm:$0xff] %v394
        %s396 = sand.u32 %s109, 1
        %s397 = scalar_lea.sflag [#allocation4], %s396
        %s398 = sand.u32 %s109, 1
        %s399 = smul.addr %s398, 8
        %s400 = scalar_lea.vmem [#allocation8], %s399
        // Predicated region
        $region45: #{tpu_custom_call.1} parent=31 // pred_check
          %p401 = pneg %p119
        $region46: #{tpu_custom_call.1} parent=31 // pred_check_branch
          %403 = sbr.rel (%p401) target = $region48
        $region47: #{tpu_custom_call.1} parent=31 // pred_region
          %s405 = ssub.s32 128, 128
          %406 = vsyncadd %s397, %s405
          %s407 = smul.addr %s23, 128
          %s408 = scalar_lea.hbm %s3, %s407
          %s410 = sshll.u32 %s400, 4
          %s411 = int_to_ptr.vmem [resolvable:$true] %s410
          %413 = dma.vmem_to_hbm [thread:$0]  %s411, 128, %s408, %s397
        $region48: #{tpu_custom_call.1} parent=31 // pred_fallthru
          _
      $region32: #{tpu_custom_call.1} parent=5 // pred_fallthru
        _
      %p414 = scmp.le.s32.totalorder 2, %s18
      // Predicated region
      $region49: #{tpu_custom_call.1} parent=5 // pred_check
        %p415 = pneg %p414
      $region50: #{tpu_custom_call.1} parent=5 // pred_check_branch
        %417 = sbr.rel (%p415) target = $region52
      $region51: #{tpu_custom_call.1} parent=5 // pred_region
        %s418 = ssub.s32 %s18, 2
        // Predicated region
        $region53: #{tpu_custom_call.1} parent=51 // pred_check
          %p419 = pneg %p125
        $region54: #{tpu_custom_call.1} parent=51 // pred_check_branch
          %421 = sbr.rel (%p419) target = $region56
        $region55: #{tpu_custom_call.1} parent=51 // pred_region
          %s422 = sand.u32 %s110, 1
          %s423 = scalar_lea.sflag [#allocation4], %s422
          %s424 = sand.u32 %s110, 1
          %s425 = smul.addr %s424, 8
          %s426 = scalar_lea.vmem [#allocation8], %s425
          %427 = dma.done %s423, 128
        $region56: #{tpu_custom_call.1} parent=51 // pred_fallthru
          _
      $region52: #{tpu_custom_call.1} parent=5 // pred_fallthru
        _
    $region6: #{tpu_custom_call.1} parent=1 // loop_footer
      %s22 = sadd.s32 1, %s18
    $region7: #{tpu_custom_call.1} parent=1 // loop_footer_branch
      %17 = sbr.rel target = $region3
    $region8: #{tpu_custom_call.1} parent=1 // loop_exit
      _
    %428 = vsyncpa [#allocation3], 1
    %s429 = scalar_lea.sflag [#allocation3], 1
    %430 = vsyncpa %s429, 1
    %431 = vsyncpa [#allocation6], 1
    %s432 = scalar_lea.sflag [#allocation6], 1
    %433 = vsyncpa %s432, 1
    %434 = vsyncpa [#allocation4], 1
    %s435 = scalar_lea.sflag [#allocation4], 1
    %436 = vsyncpa %s435, 1

</llo_original>
